<compile_context>
chip_gen: v7x
topology: tpu7x:2x2x1
jax: 0.10.0
libtpu: 0.0.40
codegen_flags: <defaults>
</compile_context>

<pallas_src>
import functools
import math

import jax
import jax.numpy as jnp
from jax.experimental import pallas as pl
from jax.experimental.pallas import tpu as pltpu

D_MODEL = 512          # hardcoded in the PyTorch source
MAXLEN = 64            # small maxlen for the synthetic test (module default is 5000)
DROPOUT_RATE = 0.1


def build_pe_table(maxlen: int, d_model: int) -> jnp.ndarray:
    """Replicates PositionEmb.__init__; returns pe with shape (maxlen, 1, d_model)."""
    position = jnp.arange(0, maxlen, dtype=jnp.float32)[:, None]                 # (maxlen, 1)
    div_term = jnp.exp(
        jnp.arange(0, d_model, 2, dtype=jnp.float32) * (-math.log(10000.0) / d_model)
    )                                                                            # (d_model/2,)
    pe = jnp.zeros((maxlen, d_model), dtype=jnp.float32)
    pe = pe.at[:, 0::2].set(jnp.sin(position * div_term))
    pe = pe.at[:, 1::2].set(jnp.cos(position * div_term))
    return pe[:, None, :]                                                        # (maxlen, 1, d_model)


# ------------------------------- kernels ------------------------------------


def _add_pe_kernel(x_ref, pe_ref, o_ref):
    # x_ref, o_ref: (ts, B, D); pe_ref: (ts, D) broadcast over the batch dim.
    o_ref[...] = (x_ref[...].astype(jnp.float32)
                  + pe_ref[...][:, None, :]).astype(o_ref.dtype)


def _add_pe_dropout_prng_kernel(seed_ref, x_ref, pe_ref, o_ref, *, threshold, scale):
    # TPU hardware PRNG, seeded per sequence-tile block so the stream is
    # deterministic and independent of megacore scheduling.
    # TODO(synk): cannot reproduce torch.nn.Dropout's exact RNG stream bitwise.
    pltpu.prng_seed(seed_ref[0], pl.program_id(0))
    y = x_ref[...].astype(jnp.float32) + pe_ref[...][:, None, :]
    bits = pltpu.bitcast(pltpu.prng_random_bits(y.shape), jnp.uint32)   # force unsigned
    keep = bits >= jnp.uint32(threshold)                                # integer threshold compare
    o_ref[...] = jnp.where(keep, y * scale, 0.0).astype(o_ref.dtype)


def _add_pe_dropout_bits_kernel(x_ref, pe_ref, bits_ref, o_ref, *, threshold, scale):
    # Portable fallback (non-TPU backends / interpret mode): random bits are
    # generated on the host and streamed in as a regular input.
    y = x_ref[...].astype(jnp.float32) + pe_ref[...][:, None, :]
    keep = bits_ref[...] >= jnp.uint32(threshold)
    o_ref[...] = jnp.where(keep, y * scale, 0.0).astype(o_ref.dtype)


# ------------------------------- wrapper -------------------------------------


def _pick_seq_tile(S, B, D, itemsize, target_bytes):
    """Largest sublane-aligned ts with ts*B*D*itemsize <= target_bytes."""
    # dtype-aware sublane alignment: 8 rows for f32, 16 for bf16, 32 for int8/fp8.
    align = max(8, 32 // max(1, itemsize))
    max_ts = max(1, target_bytes // max(1, B * D * itemsize))
    if max_ts >= S:
        return S
    return max(align, (max_ts // align) * align)


def position_emb(x, pe, seed=0, *, dropout_rate=DROPOUT_RATE, training=False,
                 ts=None, target_block_bytes=2 << 20):
    """dropout(x + pe[:S]) with x: (S, B, D) and pe: (maxlen, 1, D)."""
    S, B, D = x.shape
    itemsize = jnp.dtype(x.dtype).itemsize
    pe2d = pe[:S, 0, :].astype(jnp.float32)                   # (S, D) glue slice
    if ts is None:
        ts = _pick_seq_tile(S, B, D, itemsize, target_block_bytes)
    ts = min(ts, S)

    grid = (pl.cdiv(S, ts),)                                  # ragged last block is fine
    out_shape = jax.ShapeDtypeStruct((S, B, D), x.dtype)

    # Double-buffered x + out + pe blocks, plus headroom for the f32 / PRNG-bits
    # temporaries.  Clamp to [32 MiB, 48 MiB]: above v5e's 16 MiB scoped default,
    # safely below v7x's 64 MiB physical VMEM.
    block_bytes = 2 * ts * B * D * itemsize + ts * D * 4
    vmem_limit = int(min(48 << 20, max(32 << 20, 2 * block_bytes + (8 << 20))))
    cparams = pltpu.CompilerParams(
        dimension_semantics=("parallel",), vmem_limit_bytes=vmem_limit)

    use_dropout = training and dropout_rate > 0.0

    if not use_dropout:
        return pl.pallas_call(
            _add_pe_kernel,
            out_shape=out_shape,
            grid_spec=pltpu.PrefetchScalarGridSpec(
                num_scalar_prefetch=0, grid=grid,
                in_specs=[pl.BlockSpec((ts, B, D), lambda i: (i, 0, 0)),
                          pl.BlockSpec((ts, D), lambda i: (i, 0))],
                out_specs=pl.BlockSpec((ts, B, D), lambda i: (i, 0, 0))),
            compiler_params=cparams,
        )(x, pe2d)

    threshold = min(2 ** 32 - 1, int(round(dropout_rate * float(2 ** 32))))
    scale = 1.0 / (1.0 - dropout_rate)

    if jax.default_backend() == "tpu":
        # In-kernel hardware PRNG: no extra HBM stream for the mask.
        kernel = functools.partial(
            _add_pe_dropout_prng_kernel, threshold=threshold, scale=scale)
        return pl.pallas_call(
            kernel,
            out_shape=out_shape,
            grid_spec=pltpu.PrefetchScalarGridSpec(
                num_scalar_prefetch=1,                        # seed lands in SMEM
                grid=grid,
                in_specs=[pl.BlockSpec((ts, B, D), lambda i, seed_ref: (i, 0, 0)),
                          pl.BlockSpec((ts, D), lambda i, seed_ref: (i, 0))],
                out_specs=pl.BlockSpec((ts, B, D), lambda i, seed_ref: (i, 0, 0))),
            compiler_params=cparams,
        )(jnp.asarray([seed], dtype=jnp.int32), x, pe2d)

    # Non-TPU backend (e.g. CPU interpret mode): pltpu.prng_seed has no lowering
    # there, so stream host-generated uint32 bits instead.
    bits = jax.random.bits(jax.random.PRNGKey(seed), (S, B, D), dtype=jnp.uint32)
    kernel = functools.partial(
        _add_pe_dropout_bits_kernel, threshold=threshold, scale=scale)
    return pl.pallas_call(
        kernel,
        out_shape=out_shape,
        grid_spec=pltpu.PrefetchScalarGridSpec(
            num_scalar_prefetch=0, grid=grid,
            in_specs=[pl.BlockSpec((ts, B, D), lambda i: (i, 0, 0)),
                      pl.BlockSpec((ts, D), lambda i: (i, 0)),
                      pl.BlockSpec((ts, B, D), lambda i: (i, 0, 0))],
            out_specs=pl.BlockSpec((ts, B, D), lambda i: (i, 0, 0))),
        compiler_params=cparams,
    )(x, pe2d, bits)


if __name__ == "__main__":
    S, B, D = 8, 2, D_MODEL                                   # small seq/batch, module's d_model
    key = jax.random.PRNGKey(0)
    x = jax.random.normal(key, (S, B, D), dtype=jnp.float32)
    pe = build_pe_table(MAXLEN, D_MODEL)

    # Eval-mode forward (dropout is identity): check against a pure-JAX reference.
    out_eval = jax.block_until_ready(position_emb(x, pe, seed=0, training=False))
    ref = x + pe[:S]
    assert out_eval.shape == (S, B, D)
    assert jnp.allclose(out_eval, ref, atol=1e-6), "eval-mode mismatch vs reference"

    # Training-mode forward: every element is either 0 (dropped) or (x+pe)/(1-p),
    # and roughly `p` of the elements are dropped.
    out_train = jax.block_until_ready(position_emb(x, pe, seed=1234, training=True))
    assert out_train.shape == (S, B, D)
    scale = 1.0 / (1.0 - DROPOUT_RATE)
    ok = jnp.isclose(out_train, 0.0) | jnp.isclose(out_train, ref * scale, atol=1e-5)
    assert bool(jnp.all(ok)), "training-mode values are not in {0, (x+pe)/(1-p)}"
    drop_frac = float(jnp.mean(jnp.isclose(out_train, 0.0).astype(jnp.float32)))
    assert 0.02 < drop_frac < 0.30, f"unexpected drop fraction {drop_frac}"

    print("KERNEL_OK")
</pallas_src>

<mosaic_0001>
module attributes {stable_mosaic.version = 11 : i64} {
  func.func @_add_pe_kernel(%arg0: i32, %arg1: memref<8x2x512xf32, #tpu.memory_space<vmem>>, %arg2: memref<8x512xf32, #tpu.memory_space<vmem>>, %arg3: memref<8x2x512xf32, #tpu.memory_space<vmem>>) attributes {dimension_semantics = [#tpu.dimension_semantics<parallel>], iteration_bounds = array<i64: 1>, scalar_prefetch = 0 : i64, scratch_operands = 0 : i64, tpu.core_type = #tpu.core_type<tc>, window_params = [{transform_indices = @transform_0, window_bounds = array<i64: 8, 2, 512>}, {transform_indices = @transform_1, window_bounds = array<i64: 8, 512>}, {transform_indices = @transform_2, window_bounds = array<i64: 8, 2, 512>}]} {
    %c0 = arith.constant 0 : index
    %c0_0 = arith.constant 0 : index
    %c0_1 = arith.constant 0 : index
    %0 = vector.load %arg1[%c0, %c0_0, %c0_1] : memref<8x2x512xf32, #tpu.memory_space<vmem>>, vector<8x2x512xf32>
    %c0_2 = arith.constant 0 : index
    %c0_3 = arith.constant 0 : index
    %1 = vector.load %arg2[%c0_2, %c0_3] : memref<8x512xf32, #tpu.memory_space<vmem>>, vector<8x512xf32>
    %2 = vector.shape_cast %1 : vector<8x512xf32> to vector<8x1x512xf32>
    %3 = vector.broadcast %2 : vector<8x1x512xf32> to vector<8x2x512xf32>
    %4 = arith.addf %0, %3 : vector<8x2x512xf32>
    %c0_4 = arith.constant 0 : index
    %c0_5 = arith.constant 0 : index
    %c0_6 = arith.constant 0 : index
    %5 = vector.load %arg3[%c0_4, %c0_5, %c0_6] : memref<8x2x512xf32, #tpu.memory_space<vmem>>, vector<8x2x512xf32>
    tpu.vector_store %arg3[%c0_4, %c0_5, %c0_6], %4 {strides = array<i32>} : memref<8x2x512xf32, #tpu.memory_space<vmem>>, vector<8x2x512xf32>,
    return
  }
  func.func @transform_0(%arg0: i32) -> (i32, i32, i32) {
    %c0_i32 = arith.constant 0 : i32
    %c0_i32_0 = arith.constant 0 : i32
    %c0_i32_1 = arith.constant 0 : i32
    return %arg0, %c0_i32, %c0_i32_0 : i32, i32, i32
  }
  func.func @transform_1(%arg0: i32) -> (i32, i32) {
    %c0_i32 = arith.constant 0 : i32
    %c0_i32_0 = arith.constant 0 : i32
    return %arg0, %c0_i32 : i32, i32
  }
  func.func @transform_2(%arg0: i32) -> (i32, i32, i32) {
    %c0_i32 = arith.constant 0 : i32
    %c0_i32_0 = arith.constant 0 : i32
    %c0_i32_1 = arith.constant 0 : i32
    return %arg0, %c0_i32, %c0_i32_0 : i32, i32, i32
  }
}

</mosaic_0001>

<llo_original>
// kernel: tpu_custom_call.1
$region0: #{tpu_custom_call.1}
  #allocation0 [shape = 'u32[]', space=smem, size = 0x4, offset = 0x4, fixed_abs, tag = 'smem constant byte address 0x4 - core index']
  #allocation1 [shape = 'u32[144,128]{1,0:T(1,128)}', space=vmem, size = 0x12000, scoped, tag = 'internal scratch']
  %s0 = inlined_call_operand.hbm [shape: f32[8,2,512], index: 0, kind: input, shape index: {}]
  %s1 = inlined_call_operand.hbm [shape: f32[8,512], index: 1, kind: input, shape index: {}]
  %s2 = inlined_call_operand.hbm [shape: f32[8,2,512], index: 2, kind: output, shape index: {}]
  %s3 = sld [smem:[#allocation0]]
  $region26: #{tpu_custom_call.1} parent=0
    _
  %s5 = ssub.s32 1, %s3
  %s6 = scalar_select 0, %s5, %s3
  $region1: #{tpu_custom_call.1} parent=0
    #allocation2 [shape = 'u8[32768]{0}', space=vmem, size = 0x8000, scoped, tag = 'input window, operand 0, single buffered']
    #allocation3 [shape = 's32[1]{0}', space=sflag, size = 0x4, scoped, tag = 'scoped memory for tpu_custom_call.1']
    #allocation4 [shape = 's32[1]{0}', space=sflag, size = 0x4, scoped, tag = 'scoped memory for tpu_custom_call.1']
    #allocation5 [shape = 'u8[16384]{0}', space=vmem, size = 0x4000, scoped, tag = 'input window, operand 1, single buffered']
    #allocation6 [shape = 's32[1]{0}', space=sflag, size = 0x4, scoped, tag = 'scoped memory for tpu_custom_call.1']
    #allocation7 [shape = 'u8[32768]{0}', space=vmem, size = 0x8000, scoped, tag = 'output window, operand 0, single buffered']
    %7 = vsyncpa [#allocation3], 0
    %8 = vsyncpa [#allocation6], 0
    %9 = vsyncpa [#allocation4], 0
    // Predicated region
    $region2: #{tpu_custom_call.1} parent=1 // pred_check
      _
    $region3: #{tpu_custom_call.1} parent=1 // pred_check_branch
      %11 = sbr.rel (0) target = $region5
    $region4: #{tpu_custom_call.1} parent=1 // pred_region
      %s13 = ssub.s32 1024, 1024
      %14 = vsyncadd [#allocation3], %s13
      %s15 = sshll.u32 [#allocation2], 4
      %s16 = int_to_ptr.vmem [resolvable:$true] %s15
      %21 = dma.hbm_to_vmem [thread:$0]  %s0, 1024, %s16, [#allocation3], 128, 128, 8
    $region5: #{tpu_custom_call.1} parent=1 // pred_fallthru
      _
    // Predicated region
    $region6: #{tpu_custom_call.1} parent=1 // pred_check
      _
    $region7: #{tpu_custom_call.1} parent=1 // pred_check_branch
      %23 = sbr.rel (0) target = $region9
    $region8: #{tpu_custom_call.1} parent=1 // pred_region
      %s25 = ssub.s32 512, 512
      %26 = vsyncadd [#allocation6], %s25
      %s28 = sshll.u32 [#allocation5], 4
      %s29 = int_to_ptr.vmem [resolvable:$true] %s28
      %31 = dma.hbm_to_vmem [thread:$0]  %s1, 512, %s29, [#allocation6]
    $region9: #{tpu_custom_call.1} parent=1 // pred_fallthru
      _
    // Predicated region
    $region10: #{tpu_custom_call.1} parent=1 // pred_check
      _
    $region11: #{tpu_custom_call.1} parent=1 // pred_check_branch
      %33 = sbr.rel (0) target = $region13
    $region12: #{tpu_custom_call.1} parent=1 // pred_region
      %34 = dma.done [#allocation3], 1024
    $region13: #{tpu_custom_call.1} parent=1 // pred_fallthru
      _
    // Predicated region
    $region14: #{tpu_custom_call.1} parent=1 // pred_check
      _
    $region15: #{tpu_custom_call.1} parent=1 // pred_check_branch
      %36 = sbr.rel (0) target = $region17
    $region16: #{tpu_custom_call.1} parent=1 // pred_region
      %37 = dma.done [#allocation6], 512
    $region17: #{tpu_custom_call.1} parent=1 // pred_fallthru
      _
    %v38 = vld [vmem:[#allocation2] sm:$0xff]
    %v39 = vld [vmem:[#allocation2 + $0x8] sm:$0xff]
    %v40 = vld [vmem:[#allocation2 + $0x10] sm:$0xff]
    %v41 = vld [vmem:[#allocation2 + $0x18] sm:$0xff]
    %v42 = vld [vmem:[#allocation2 + $0x20] sm:$0xff]
    %v43 = vld [vmem:[#allocation2 + $0x28] sm:$0xff]
    %v44 = vld [vmem:[#allocation2 + $0x30] sm:$0xff]
    %v45 = vld [vmem:[#allocation2 + $0x38] sm:$0xff]
    %v46 = vld [vmem:[#allocation5] sm:$0xff]
    %v47 = vld [vmem:[#allocation5 + $0x8] sm:$0xff]
    %v48 = vld [vmem:[#allocation5 + $0x10] sm:$0xff]
    %v49 = vld [vmem:[#allocation5 + $0x18] sm:$0xff]
    %v54 = vcombine.low %v46, %v47
    %v55 = vcombine.high %v46, %v47
    %v56 = vcombine.low %v48, %v49
    %v57 = vcombine.high %v48, %v49
    %v59 = vunpack.c.l.s4 1966171168
    %v60 = vunpack.c.0.s8 %v59
    %v61 = vlaneseq
    %v62 = vshrl.u32 %v61, 7
    %v63 = vsub.s32 %v60, %v62
    %v64 = vrot.slane %v54, %v63
    %v66 = vunpack.c.l.s4 1966171168
    %v67 = vunpack.c.0.s8 %v66
    %v68 = vlaneseq
    %v69 = vshrl.u32 %v68, 7
    %v70 = vsub.s32 %v67, %v69
    %v71 = vrot.slane %v55, %v70
    %v73 = vunpack.c.l.s4 1966171168
    %v74 = vunpack.c.0.s8 %v73
    %v75 = vlaneseq
    %v76 = vshrl.u32 %v75, 7
    %v77 = vsub.s32 %v74, %v76
    %v78 = vrot.slane %v56, %v77
    %v80 = vunpack.c.l.s4 1966171168
    %v81 = vunpack.c.0.s8 %v80
    %v82 = vlaneseq
    %v83 = vshrl.u32 %v82, 7
    %v84 = vsub.s32 %v81, %v83
    %v85 = vrot.slane %v57, %v84
    %v86 = vcombine.low %v64, %v78
    %v87 = vcombine.high %v64, %v78
    %v88 = vcombine.low %v71, %v85
    %v89 = vcombine.high %v71, %v85
    %v91 = vunpack.c.l.s4 1966171168
    %v92 = vunpack.c.0.s8 %v91
    %v93 = vlaneseq
    %v94 = vshrl.u32 %v93, 7
    %v95 = vsub.s32 %v92, %v94
    %v96 = vrot.slane %v86, %v95
    %v98 = vunpack.c.l.s4 1966171168
    %v99 = vunpack.c.0.s8 %v98
    %v100 = vlaneseq
    %v101 = vshrl.u32 %v100, 7
    %v102 = vsub.s32 %v99, %v101
    %v103 = vrot.slane %v88, %v102
    %v105 = vunpack.c.l.s4 1966171168
    %v106 = vunpack.c.0.s8 %v105
    %v107 = vlaneseq
    %v108 = vshrl.u32 %v107, 7
    %v109 = vsub.s32 %v106, %v108
    %v110 = vrot.slane %v87, %v109
    %v112 = vunpack.c.l.s4 1966171168
    %v113 = vunpack.c.0.s8 %v112
    %v114 = vlaneseq
    %v115 = vshrl.u32 %v114, 7
    %v116 = vsub.s32 %v113, %v115
    %v117 = vrot.slane %v89, %v116
    %v118 = vcombine.high %v96, %v96
    %v119 = vcombine.high %v103, %v103
    %v120 = vcombine.high %v110, %v110
    %v121 = vcombine.high %v117, %v117
    %v122 = vlaneseq
    %v123 = vshrl.u32 %v122, 7
    %v124 = vsub.s32 0, %v123
    %v125 = vrot.slane %v96, %v124
    %v126 = vlaneseq
    %v127 = vshrl.u32 %v126, 7
    %v128 = vsub.s32 1, %v127
    %v129 = vrot.slane %v96, %v128
    %v130 = vlaneseq
    %v131 = vshrl.u32 %v130, 7
    %v132 = vsub.s32 2, %v131
    %v133 = vrot.slane %v96, %v132
    %v134 = vlaneseq
    %v135 = vshrl.u32 %v134, 7
    %v136 = vsub.s32 3, %v135
    %v137 = vrot.slane %v96, %v136
    %v138 = vlaneseq
    %v139 = vshrl.u32 %v138, 7
    %v140 = vsub.s32 0, %v139
    %v141 = vrot.slane %v110, %v140
    %v142 = vlaneseq
    %v143 = vshrl.u32 %v142, 7
    %v144 = vsub.s32 1, %v143
    %v145 = vrot.slane %v110, %v144
    %v146 = vlaneseq
    %v147 = vshrl.u32 %v146, 7
    %v148 = vsub.s32 2, %v147
    %v149 = vrot.slane %v110, %v148
    %v150 = vlaneseq
    %v151 = vshrl.u32 %v150, 7
    %v152 = vsub.s32 3, %v151
    %v153 = vrot.slane %v110, %v152
    %v154 = vlaneseq
    %v155 = vshrl.u32 %v154, 7
    %v156 = vsub.s32 0, %v155
    %v157 = vrot.slane %v118, %v156
    %v158 = vlaneseq
    %v159 = vshrl.u32 %v158, 7
    %v160 = vsub.s32 1, %v159
    %v161 = vrot.slane %v118, %v160
    %v162 = vlaneseq
    %v163 = vshrl.u32 %v162, 7
    %v164 = vsub.s32 2, %v163
    %v165 = vrot.slane %v118, %v164
    %v166 = vlaneseq
    %v167 = vshrl.u32 %v166, 7
    %v168 = vsub.s32 3, %v167
    %v169 = vrot.slane %v118, %v168
    %v170 = vlaneseq
    %v171 = vshrl.u32 %v170, 7
    %v172 = vsub.s32 0, %v171
    %v173 = vrot.slane %v120, %v172
    %v174 = vlaneseq
    %v175 = vshrl.u32 %v174, 7
    %v176 = vsub.s32 1, %v175
    %v177 = vrot.slane %v120, %v176
    %v178 = vlaneseq
    %v179 = vshrl.u32 %v178, 7
    %v180 = vsub.s32 2, %v179
    %v181 = vrot.slane %v120, %v180
    %v182 = vlaneseq
    %v183 = vshrl.u32 %v182, 7
    %v184 = vsub.s32 3, %v183
    %v185 = vrot.slane %v120, %v184
    %v186 = vlaneseq
    %v187 = vshrl.u32 %v186, 7
    %v188 = vsub.s32 0, %v187
    %v189 = vrot.slane %v103, %v188
    %v190 = vlaneseq
    %v191 = vshrl.u32 %v190, 7
    %v192 = vsub.s32 1, %v191
    %v193 = vrot.slane %v103, %v192
    %v194 = vlaneseq
    %v195 = vshrl.u32 %v194, 7
    %v196 = vsub.s32 2, %v195
    %v197 = vrot.slane %v103, %v196
    %v198 = vlaneseq
    %v199 = vshrl.u32 %v198, 7
    %v200 = vsub.s32 3, %v199
    %v201 = vrot.slane %v103, %v200
    %v202 = vlaneseq
    %v203 = vshrl.u32 %v202, 7
    %v204 = vsub.s32 0, %v203
    %v205 = vrot.slane %v117, %v204
    %v206 = vlaneseq
    %v207 = vshrl.u32 %v206, 7
    %v208 = vsub.s32 1, %v207
    %v209 = vrot.slane %v117, %v208
    %v210 = vlaneseq
    %v211 = vshrl.u32 %v210, 7
    %v212 = vsub.s32 2, %v211
    %v213 = vrot.slane %v117, %v212
    %v214 = vlaneseq
    %v215 = vshrl.u32 %v214, 7
    %v216 = vsub.s32 3, %v215
    %v217 = vrot.slane %v117, %v216
    %v218 = vlaneseq
    %v219 = vshrl.u32 %v218, 7
    %v220 = vsub.s32 0, %v219
    %v221 = vrot.slane %v119, %v220
    %v222 = vlaneseq
    %v223 = vshrl.u32 %v222, 7
    %v224 = vsub.s32 1, %v223
    %v225 = vrot.slane %v119, %v224
    %v226 = vlaneseq
    %v227 = vshrl.u32 %v226, 7
    %v228 = vsub.s32 2, %v227
    %v229 = vrot.slane %v119, %v228
    %v230 = vlaneseq
    %v231 = vshrl.u32 %v230, 7
    %v232 = vsub.s32 3, %v231
    %v233 = vrot.slane %v119, %v232
    %v234 = vlaneseq
    %v235 = vshrl.u32 %v234, 7
    %v236 = vsub.s32 0, %v235
    %v237 = vrot.slane %v121, %v236
    %v238 = vlaneseq
    %v239 = vshrl.u32 %v238, 7
    %v240 = vsub.s32 1, %v239
    %v241 = vrot.slane %v121, %v240
    %v242 = vlaneseq
    %v243 = vshrl.u32 %v242, 7
    %v244 = vsub.s32 2, %v243
    %v245 = vrot.slane %v121, %v244
    %v246 = vlaneseq
    %v247 = vshrl.u32 %v246, 7
    %v248 = vsub.s32 3, %v247
    %v249 = vrot.slane %v121, %v248
    %v250 = vcombine.low %v125, %v129
    %v251 = vcombine.low %v133, %v137
    %v253 = vunpack.c.l.s4 1983009808
    %v254 = vunpack.c.0.s8 %v253
    %v255 = vlaneseq
    %v256 = vshrl.u32 %v255, 7
    %v257 = vsub.s32 %v254, %v256
    %v258 = vrot.slane %v250, %v257
    %v260 = vunpack.c.l.s4 1983009808
    %v261 = vunpack.c.0.s8 %v260
    %v262 = vlaneseq
    %v263 = vshrl.u32 %v262, 7
    %v264 = vsub.s32 %v261, %v263
    %v265 = vrot.slane %v251, %v264
    %v266 = vcombine.low %v258, %v265
    %v267 = vcombine.low %v141, %v145
    %v268 = vcombine.low %v149, %v153
    %v270 = vunpack.c.l.s4 1983009808
    %v271 = vunpack.c.0.s8 %v270
    %v272 = vlaneseq
    %v273 = vshrl.u32 %v272, 7
    %v274 = vsub.s32 %v271, %v273
    %v275 = vrot.slane %v267, %v274
    %v277 = vunpack.c.l.s4 1983009808
    %v278 = vunpack.c.0.s8 %v277
    %v279 = vlaneseq
    %v280 = vshrl.u32 %v279, 7
    %v281 = vsub.s32 %v278, %v280
    %v282 = vrot.slane %v268, %v281
    %v283 = vcombine.low %v275, %v282
    %v284 = vcombine.low %v157, %v161
    %v285 = vcombine.low %v165, %v169
    %v287 = vunpack.c.l.s4 1983009808
    %v288 = vunpack.c.0.s8 %v287
    %v289 = vlaneseq
    %v290 = vshrl.u32 %v289, 7
    %v291 = vsub.s32 %v288, %v290
    %v292 = vrot.slane %v284, %v291
    %v294 = vunpack.c.l.s4 1983009808
    %v295 = vunpack.c.0.s8 %v294
    %v296 = vlaneseq
    %v297 = vshrl.u32 %v296, 7
    %v298 = vsub.s32 %v295, %v297
    %v299 = vrot.slane %v285, %v298
    %v300 = vcombine.low %v292, %v299
    %v301 = vcombine.low %v173, %v177
    %v302 = vcombine.low %v181, %v185
    %v304 = vunpack.c.l.s4 1983009808
    %v305 = vunpack.c.0.s8 %v304
    %v306 = vlaneseq
    %v307 = vshrl.u32 %v306, 7
    %v308 = vsub.s32 %v305, %v307
    %v309 = vrot.slane %v301, %v308
    %v311 = vunpack.c.l.s4 1983009808
    %v312 = vunpack.c.0.s8 %v311
    %v313 = vlaneseq
    %v314 = vshrl.u32 %v313, 7
    %v315 = vsub.s32 %v312, %v314
    %v316 = vrot.slane %v302, %v315
    %v317 = vcombine.low %v309, %v316
    %v318 = vcombine.low %v189, %v193
    %v319 = vcombine.low %v197, %v201
    %v321 = vunpack.c.l.s4 1983009808
    %v322 = vunpack.c.0.s8 %v321
    %v323 = vlaneseq
    %v324 = vshrl.u32 %v323, 7
    %v325 = vsub.s32 %v322, %v324
    %v326 = vrot.slane %v318, %v325
    %v328 = vunpack.c.l.s4 1983009808
    %v329 = vunpack.c.0.s8 %v328
    %v330 = vlaneseq
    %v331 = vshrl.u32 %v330, 7
    %v332 = vsub.s32 %v329, %v331
    %v333 = vrot.slane %v319, %v332
    %v334 = vcombine.low %v326, %v333
    %v335 = vcombine.low %v205, %v209
    %v336 = vcombine.low %v213, %v217
    %v338 = vunpack.c.l.s4 1983009808
    %v339 = vunpack.c.0.s8 %v338
    %v340 = vlaneseq
    %v341 = vshrl.u32 %v340, 7
    %v342 = vsub.s32 %v339, %v341
    %v343 = vrot.slane %v335, %v342
    %v345 = vunpack.c.l.s4 1983009808
    %v346 = vunpack.c.0.s8 %v345
    %v347 = vlaneseq
    %v348 = vshrl.u32 %v347, 7
    %v349 = vsub.s32 %v346, %v348
    %v350 = vrot.slane %v336, %v349
    %v351 = vcombine.low %v343, %v350
    %v352 = vcombine.low %v221, %v225
    %v353 = vcombine.low %v229, %v233
    %v355 = vunpack.c.l.s4 1983009808
    %v356 = vunpack.c.0.s8 %v355
    %v357 = vlaneseq
    %v358 = vshrl.u32 %v357, 7
    %v359 = vsub.s32 %v356, %v358
    %v360 = vrot.slane %v352, %v359
    %v362 = vunpack.c.l.s4 1983009808
    %v363 = vunpack.c.0.s8 %v362
    %v364 = vlaneseq
    %v365 = vshrl.u32 %v364, 7
    %v366 = vsub.s32 %v363, %v365
    %v367 = vrot.slane %v353, %v366
    %v368 = vcombine.low %v360, %v367
    %v369 = vcombine.low %v237, %v241
    %v370 = vcombine.low %v245, %v249
    %v372 = vunpack.c.l.s4 1983009808
    %v373 = vunpack.c.0.s8 %v372
    %v374 = vlaneseq
    %v375 = vshrl.u32 %v374, 7
    %v376 = vsub.s32 %v373, %v375
    %v377 = vrot.slane %v369, %v376
    %v379 = vunpack.c.l.s4 1983009808
    %v380 = vunpack.c.0.s8 %v379
    %v381 = vlaneseq
    %v382 = vshrl.u32 %v381, 7
    %v383 = vsub.s32 %v380, %v382
    %v384 = vrot.slane %v370, %v383
    %v385 = vcombine.low %v377, %v384
    %v394 = vadd.f32 %v38, %v266
    %v395 = vadd.f32 %v39, %v283
    %v396 = vadd.f32 %v40, %v300
    %v397 = vadd.f32 %v41, %v317
    %v398 = vadd.f32 %v42, %v334
    %v399 = vadd.f32 %v43, %v351
    %v400 = vadd.f32 %v44, %v368
    %v401 = vadd.f32 %v45, %v385
    %402 = vst [vmem:[#allocation7] sm:$0xff] %v394
    %403 = vst [vmem:[#allocation7 + $0x8] sm:$0xff] %v395
    %404 = vst [vmem:[#allocation7 + $0x10] sm:$0xff] %v396
    %405 = vst [vmem:[#allocation7 + $0x18] sm:$0xff] %v397
    %406 = vst [vmem:[#allocation7 + $0x20] sm:$0xff] %v398
    %407 = vst [vmem:[#allocation7 + $0x28] sm:$0xff] %v399
    %408 = vst [vmem:[#allocation7 + $0x30] sm:$0xff] %v400
    %409 = vst [vmem:[#allocation7 + $0x38] sm:$0xff] %v401
    // Predicated region
    $region18: #{tpu_custom_call.1} parent=1 // pred_check
      _
    $region19: #{tpu_custom_call.1} parent=1 // pred_check_branch
      %411 = sbr.rel (0) target = $region21
    $region20: #{tpu_custom_call.1} parent=1 // pred_region
      %s413 = ssub.s32 1024, 1024
      %414 = vsyncadd [#allocation4], %s413
      %s415 = sshll.u32 [#allocation7], 4
      %s416 = int_to_ptr.vmem [resolvable:$true] %s415
      %421 = dma.vmem_to_hbm [thread:$0]  %s416, 1024, %s2, [#allocation4], 128, 128, 8
    $region21: #{tpu_custom_call.1} parent=1 // pred_fallthru
      _
    // Predicated region
    $region22: #{tpu_custom_call.1} parent=1 // pred_check
      _
    $region23: #{tpu_custom_call.1} parent=1 // pred_check_branch
      %423 = sbr.rel (0) target = $region25
    $region24: #{tpu_custom_call.1} parent=1 // pred_region
      %424 = dma.done [#allocation4], 1024
    $region25: #{tpu_custom_call.1} parent=1 // pred_fallthru
      _
    %425 = vsyncpa [#allocation3], 1
    %426 = vsyncpa [#allocation6], 1
    %427 = vsyncpa [#allocation4], 1

</llo_original>
